<compile_context>
chip_gen: v6e
topology: v6e:2x2x1
jax: 0.10.0
libtpu: 0.0.40
codegen_flags: <defaults>
</compile_context>

<pallas_src>
import functools

import jax
import jax.numpy as jnp
from jax.experimental import pallas as pl
from jax.experimental.pallas import tpu as pltpu


def _round_up(x, m):
    return (x + m - 1) // m * m


def _leaky_relu(x, slope=0.2):
    return jnp.where(x > 0, x, slope * x)


# ----------------------------------------------------------------------------
# Fused cGAN kernel: generator (3 linears) + discriminator (2 linears).
# Weights live in two pre-packed bf16 slabs sliced with static offsets;
# matmuls hit the MXU in bf16 with f32 accumulation; elementwise stays f32.
# ----------------------------------------------------------------------------
def cgan_kernel(noise_ref, labels_ref, w128_ref, w64_ref, bias_ref, out_ref, *,
                noise_dim, nc_pad, h1, h2, data_dim, hd, logit_pad,
                off64, off128):
    batch = noise_ref.shape[0]
    o_w1n, o_d1x, o_dw2, o_gw3 = off64      # rows in the 64-wide slab
    o_gw2, o_w1c = off128                   # rows in the 128-wide slab

    # Packed biases: one (8, 128) f32 tile, statically sliced.
    bias = bias_ref[...]
    g_b1 = bias[0:1, :h1]
    g_b2 = bias[1:2, :h2]
    g_b3 = bias[2:3, :data_dim]
    d_b1 = bias[3:4, :hd]
    d_b2 = bias[4:5, :logit_pad]            # only lane 0 is meaningful

    # In-kernel one-hot, built directly in bf16 (no XLA one_hot/concat glue).
    labels = labels_ref[...]                                      # [B, 1] i32
    iota = jax.lax.broadcasted_iota(jnp.int32, (batch, nc_pad), 1)
    one_hot = (iota == labels).astype(jnp.bfloat16)                # [B, nc_pad]
    noise_bf = noise_ref[...].astype(jnp.bfloat16)

    # Single fused one-hot contribution for BOTH networks: [B, h1 + hd].
    oh = jnp.dot(one_hot, w128_ref[o_w1c:o_w1c + nc_pad, :],
                 preferred_element_type=jnp.float32)

    # ---- Generator ----
    # layer 1: Linear(noise ++ onehot) + LeakyReLU(0.2), split-weight form.
    h = jnp.dot(noise_bf, w64_ref[o_w1n:o_w1n + noise_dim, :],
                preferred_element_type=jnp.float32)
    h = _leaky_relu(h + oh[:, :h1] + g_b1)
    # layer 2: Linear + LeakyReLU(0.2)
    h = jnp.dot(h.astype(jnp.bfloat16), w128_ref[o_gw2:o_gw2 + h1, :],
                preferred_element_type=jnp.float32)
    h = _leaky_relu(h + g_b2)
    # layer 3: Linear + tanh (sample in [-1, 1])
    fake = jnp.dot(h.astype(jnp.bfloat16), w64_ref[o_gw3:o_gw3 + h2, :],
                   preferred_element_type=jnp.float32)
    fake = jnp.tanh(fake + g_b3)

    # ---- Discriminator on [fake ++ onehot] ----
    d = jnp.dot(fake.astype(jnp.bfloat16), w64_ref[o_d1x:o_d1x + data_dim, :],
                preferred_element_type=jnp.float32)
    d = _leaky_relu(d + oh[:, h1:h1 + hd] + d_b1)
    # d_w2 is zero-padded to `logit_pad` columns, so this dot produces a full
    # 64-lane block whose lane 0 is the logit and the rest are zeros.
    logit_blk = jnp.dot(d.astype(jnp.bfloat16), w64_ref[o_dw2:o_dw2 + hd, :],
                        preferred_element_type=jnp.float32) + d_b2

    # ---- Lane-dense output: two direct slice stores (no concatenate) ----
    out_ref[:, :data_dim] = fake.astype(out_ref.dtype)
    out_ref[:, data_dim:] = logit_blk.astype(out_ref.dtype)


# ----------------------------------------------------------------------------
# Parameter construction: normal(0, 0.02) weights (as in init_weights), bf16
# for the MXU, packed into two slabs + one f32 bias tile.  Returns the raw f32
# weights too (for the pure-JAX reference check).
# ----------------------------------------------------------------------------
def make_params(key, noise_dim, data_dim, num_classes,
                gen_hidden=(64, 128), disc_hidden=64):
    h1, h2 = gen_hidden
    hd = disc_hidden
    narrow, wide = 64, 128
    slab_w = _round_up(data_dim + 1, 128)
    logit_pad = slab_w - data_dim
    # This packing scheme assumes the standard small-cGAN widths below.
    assert h1 == narrow and hd == narrow and data_dim == narrow
    assert h2 == wide and h1 + hd <= wide and logit_pad == narrow
    nc_pad = _round_up(num_classes, 8)

    ks = jax.random.split(key, 7)
    std = 0.02

    def w(k, fi, fo):
        return std * jax.random.normal(k, (fi, fo), dtype=jnp.float32)

    raw = dict(
        g_w1n=w(ks[0], noise_dim, h1),   # generator L1, noise part
        g_w1c=w(ks[1], num_classes, h1),  # generator L1, class part
        g_w2=w(ks[2], h1, h2),
        g_w3=w(ks[3], h2, data_dim),
        d_w1x=w(ks[4], data_dim, hd),     # discriminator L1, data part
        d_w1c=w(ks[5], num_classes, hd),  # discriminator L1, class part
        d_w2=w(ks[6], hd, 1),
    )

    # --- 64-wide slab: [g_w1n ; d_w1x ; d_w2 (col-padded) ; g_w3] ---
    o_w1n = 0
    o_d1x = o_w1n + _round_up(noise_dim, 8)
    o_dw2 = o_d1x + _round_up(data_dim, 8)
    o_gw3 = o_dw2 + _round_up(hd, 8)
    n64 = o_gw3 + _round_up(h2, 8)
    w64 = jnp.zeros((n64, narrow), jnp.float32)
    w64 = w64.at[o_w1n:o_w1n + noise_dim, :h1].set(raw["g_w1n"])
    w64 = w64.at[o_d1x:o_d1x + data_dim, :hd].set(raw["d_w1x"])
    w64 = w64.at[o_dw2:o_dw2 + hd, :1].set(raw["d_w2"])
    w64 = w64.at[o_gw3:o_gw3 + h2, :data_dim].set(raw["g_w3"])
    w64 = w64.astype(jnp.bfloat16)

    # --- 128-wide slab: [g_w2 ; [g_w1c | d_w1c] (row-padded to nc_pad)] ---
    o_gw2 = 0
    o_w1c = o_gw2 + _round_up(h1, 8)
    n128 = o_w1c + nc_pad
    w128 = jnp.zeros((n128, wide), jnp.float32)
    w128 = w128.at[o_gw2:o_gw2 + h1, :h2].set(raw["g_w2"])
    w128 = w128.at[o_w1c:o_w1c + num_classes, :h1].set(raw["g_w1c"])
    w128 = w128.at[o_w1c:o_w1c + num_classes, h1:h1 + hd].set(raw["d_w1c"])
    w128 = w128.astype(jnp.bfloat16)

    # Biases packed into one (8, 128) f32 tile (zero here; the reference
    # init_weights never touches Linear biases).
    # TODO(synk): PyTorch nn.Linear default bias init is uniform(+-1/sqrt(fan_in));
    #             we keep zeros as in the previous version.
    bias_pack = jnp.zeros((8, wide), jnp.float32)

    dims = dict(noise_dim=noise_dim, num_classes=num_classes, nc_pad=nc_pad,
                h1=h1, h2=h2, data_dim=data_dim, hd=hd, logit_pad=logit_pad,
                slab_w=slab_w,
                off64=(o_w1n, o_d1x, o_dw2, o_gw3), off128=(o_gw2, o_w1c))
    return w128, w64, bias_pack, dims, raw


# ----------------------------------------------------------------------------
# GAN forward factory: noise + labels -> fake data -> discriminator logits.
# Single fused pallas_call; only the output slicing lives in plain JAX.
# ----------------------------------------------------------------------------
def make_gan_forward(dims, batch):
    noise_dim = dims["noise_dim"]
    data_dim = dims["data_dim"]
    slab_w = dims["slab_w"]
    h1, h2, hd = dims["h1"], dims["h2"], dims["hd"]
    nc = dims["num_classes"]
    logit_pad = dims["logit_pad"]

    # Batch tile: fills the MXU M-dim at realistic batch sizes and lets the
    # parallel grid axis shard across v7x's two TensorCores.
    tb = min(batch, 128)
    assert batch % tb == 0
    grid = (batch // tb,)

    kernel = functools.partial(
        cgan_kernel,
        noise_dim=noise_dim, nc_pad=dims["nc_pad"], h1=h1, h2=h2,
        data_dim=data_dim, hd=hd, logit_pad=logit_pad,
        off64=dims["off64"], off128=dims["off128"])

    flops = 2 * batch * (noise_dim * h1 + nc * (h1 + hd) + h1 * h2
                         + h2 * data_dim + data_dim * hd + hd * logit_pad)

    @jax.jit
    def forward(noise, labels, w128, w64, bias_pack):
        b = noise.shape[0]
        labels_2d = labels.reshape(b, 1).astype(jnp.int32)

        bytes_accessed = (noise.size * 4 + labels_2d.size * 4
                          + w128.size * 2 + w64.size * 2
                          + bias_pack.size * 4 + b * slab_w * 4)

        slab = pl.pallas_call(
            kernel,
            out_shape=jax.ShapeDtypeStruct((b, slab_w), jnp.float32),
            grid_spec=pltpu.PrefetchScalarGridSpec(
                num_scalar_prefetch=0,
                grid=grid,
                in_specs=[
                    pl.BlockSpec((tb, noise_dim), lambda i: (i, 0)),
                    pl.BlockSpec((tb, 1), lambda i: (i, 0)),
                    pl.BlockSpec(w128.shape, lambda i: (0, 0)),
                    pl.BlockSpec(w64.shape, lambda i: (0, 0)),
                    pl.BlockSpec(bias_pack.shape, lambda i: (0, 0)),
                ],
                out_specs=pl.BlockSpec((tb, slab_w), lambda i: (i, 0)),
            ),
            compiler_params=pltpu.CompilerParams(
                dimension_semantics=("parallel",)),
            cost_estimate=pl.CostEstimate(
                flops=flops,
                transcendentals=batch * data_dim,   # tanh
                bytes_accessed=bytes_accessed),
        )(noise, labels_2d, w128, w64, bias_pack)

        fake = slab[:, :data_dim]
        logits = slab[:, data_dim:data_dim + 1]
        return fake, logits

    return forward


# ----------------------------------------------------------------------------
# Pure-JAX reference (same bf16 weight quantization / f32 accumulation).
# ----------------------------------------------------------------------------
def gan_reference(noise, labels, raw, num_classes):
    bf = lambda x: x.astype(jnp.bfloat16)
    lrelu = lambda x: jnp.where(x > 0, x, 0.2 * x)
    one_hot = jax.nn.one_hot(labels, num_classes, dtype=jnp.float32)

    g_w1 = jnp.concatenate([raw["g_w1n"], raw["g_w1c"]], axis=0)
    d_w1 = jnp.concatenate([raw["d_w1x"], raw["d_w1c"]], axis=0)

    g_in = jnp.concatenate([noise, one_hot], axis=-1)
    h = jnp.dot(bf(g_in), bf(g_w1), preferred_element_type=jnp.float32)
    h = lrelu(h)
    h = jnp.dot(bf(h), bf(raw["g_w2"]), preferred_element_type=jnp.float32)
    h = lrelu(h)
    fake = jnp.tanh(jnp.dot(bf(h), bf(raw["g_w3"]),
                            preferred_element_type=jnp.float32))

    d_in = jnp.concatenate([fake, one_hot], axis=-1)
    d = jnp.dot(bf(d_in), bf(d_w1), preferred_element_type=jnp.float32)
    d = lrelu(d)
    logit = jnp.dot(bf(d), bf(raw["d_w2"]), preferred_element_type=jnp.float32)
    return fake, logit


if __name__ == "__main__":
    # Small cGAN configuration.
    noise_dim = 32            # noise_shape (concatenated with num_classes)
    data_dim = 64             # data_shape[0]
    num_classes = 10
    batch = 8

    key = jax.random.PRNGKey(0)
    k_params, k_noise, k_labels = jax.random.split(key, 3)

    w128, w64, bias_pack, dims, raw = make_params(
        k_params, noise_dim, data_dim, num_classes)
    forward = make_gan_forward(dims, batch)

    noise = jax.random.normal(k_noise, (batch, noise_dim), dtype=jnp.float32)
    labels = jax.random.randint(k_labels, (batch,), 0, num_classes)

    fake, logits = forward(noise, labels, w128, w64, bias_pack)
    jax.block_until_ready((fake, logits))

    assert fake.shape == (batch, data_dim)
    assert logits.shape == (batch, 1)
    assert bool(jnp.all(jnp.isfinite(fake)))
    assert bool(jnp.all(jnp.isfinite(logits)))
    assert bool(jnp.all(jnp.abs(fake) <= 1.0))      # tanh output range

    # Correctness vs. pure-JAX reference (same bf16 weight quantization).
    fake_ref, logits_ref = gan_reference(noise, labels, raw, num_classes)
    assert bool(jnp.allclose(fake, fake_ref, atol=1e-2, rtol=1e-2))
    assert bool(jnp.allclose(logits, logits_ref, atol=1e-2, rtol=1e-2))

    print("KERNEL_OK")
</pallas_src>

<mosaic_0001>
module attributes {stable_mosaic.version = 11 : i64} {
  func.func @cgan_kernel(%arg0: i32, %arg1: memref<8x32xf32, #tpu.memory_space<vmem>>, %arg2: memref<8x1xi32, #tpu.memory_space<vmem>>, %arg3: memref<80x128xbf16, #tpu.memory_space<vmem>>, %arg4: memref<288x64xbf16, #tpu.memory_space<vmem>>, %arg5: memref<8x128xf32, #tpu.memory_space<vmem>>, %arg6: memref<8x128xf32, #tpu.memory_space<vmem>>) attributes {dimension_semantics = [#tpu.dimension_semantics<parallel>], iteration_bounds = array<i64: 1>, scalar_prefetch = 0 : i64, scratch_operands = 0 : i64, tpu.core_type = #tpu.core_type<tc>, window_params = [{transform_indices = @transform_0, window_bounds = array<i64: 8, 32>}, {transform_indices = @transform_1, window_bounds = array<i64: 8, 1>}, {pipeline_mode = #tpu.pipeline_mode<synchronous>, transform_indices = @transform_2, window_bounds = array<i64: 80, 128>}, {pipeline_mode = #tpu.pipeline_mode<synchronous>, transform_indices = @transform_3, window_bounds = array<i64: 288, 64>}, {pipeline_mode = #tpu.pipeline_mode<synchronous>, transform_indices = @transform_4, window_bounds = array<i64: 8, 128>}, {transform_indices = @transform_5, window_bounds = array<i64: 8, 128>}]} {
    %c0 = arith.constant 0 : index
    %c0_0 = arith.constant 0 : index
    %0 = vector.load %arg5[%c0, %c0_0] : memref<8x128xf32, #tpu.memory_space<vmem>>, vector<8x128xf32>
    %1 = vector.extract_strided_slice %0 {offsets = [0, 0], sizes = [1, 64], strides = [1, 1]} : vector<8x128xf32> to vector<1x64xf32>
    %2 = vector.extract_strided_slice %0 {offsets = [1, 0], sizes = [1, 128], strides = [1, 1]} : vector<8x128xf32> to vector<1x128xf32>
    %3 = vector.extract_strided_slice %0 {offsets = [2, 0], sizes = [1, 64], strides = [1, 1]} : vector<8x128xf32> to vector<1x64xf32>
    %4 = vector.extract_strided_slice %0 {offsets = [3, 0], sizes = [1, 64], strides = [1, 1]} : vector<8x128xf32> to vector<1x64xf32>
    %5 = vector.extract_strided_slice %0 {offsets = [4, 0], sizes = [1, 64], strides = [1, 1]} : vector<8x128xf32> to vector<1x64xf32>
    %c0_1 = arith.constant 0 : index
    %c0_2 = arith.constant 0 : index
    %6 = vector.load %arg2[%c0_1, %c0_2] : memref<8x1xi32, #tpu.memory_space<vmem>>, vector<8x1xi32>
    %7 = tpu.iota {dimensions = array<i32: 1>} : vector<8x16xi32>
    %8 = vector.broadcast %6 : vector<8x1xi32> to vector<8x16xi32>
    %9 = arith.cmpi eq, %7, %8 : vector<8x16xi32>
    %10 = arith.extui %9 : vector<8x16xi1> to vector<8x16xi32>
    %11 = arith.sitofp %10 : vector<8x16xi32> to vector<8x16xf32>
    %12 = arith.truncf %11 : vector<8x16xf32> to vector<8x16xbf16>
    %c0_3 = arith.constant 0 : index
    %c0_4 = arith.constant 0 : index
    %13 = vector.load %arg1[%c0_3, %c0_4] : memref<8x32xf32, #tpu.memory_space<vmem>>, vector<8x32xf32>
    %14 = arith.truncf %13 : vector<8x32xf32> to vector<8x32xbf16>
    %c64 = arith.constant 64 : index
    %c0_5 = arith.constant 0 : index
    %15 = vector.load %arg3[%c64, %c0_5] : memref<80x128xbf16, #tpu.memory_space<vmem>>, vector<16x128xbf16>
    %cst = arith.constant dense<0.000000e+00> : vector<8x128xf32>
    %16 = tpu.matmul %12, %15, %cst {dimension_numbers = #tpu.dot_dimension_numbers<[1], [0], [0], [1], [0, 0, 1, 1], [], []>} : vector<8x16xbf16>, vector<16x128xbf16>, vector<8x128xf32> -> vector<8x128xf32>
    %c0_6 = arith.constant 0 : index
    %c0_7 = arith.constant 0 : index
    %17 = vector.load %arg4[%c0_6, %c0_7] : memref<288x64xbf16, #tpu.memory_space<vmem>>, vector<32x64xbf16>
    %cst_8 = arith.constant dense<0.000000e+00> : vector<8x64xf32>
    %18 = tpu.matmul %14, %17, %cst_8 {dimension_numbers = #tpu.dot_dimension_numbers<[1], [0], [0], [1], [0, 0, 1, 1], [], []>} : vector<8x32xbf16>, vector<32x64xbf16>, vector<8x64xf32> -> vector<8x64xf32>
    %19 = vector.extract_strided_slice %16 {offsets = [0, 0], sizes = [8, 64], strides = [1, 1]} : vector<8x128xf32> to vector<8x64xf32>
    %20 = arith.addf %18, %19 : vector<8x64xf32>
    %21 = vector.broadcast %1 : vector<1x64xf32> to vector<8x64xf32>
    %22 = arith.addf %20, %21 : vector<8x64xf32>
    %cst_9 = arith.constant 0.000000e+00 : f32
    %23 = vector.broadcast %cst_9 : f32 to vector<8x64xf32>
    %24 = arith.cmpf ogt, %22, %23 : vector<8x64xf32>
    %cst_10 = arith.constant 2.000000e-01 : f32
    %25 = vector.broadcast %cst_10 : f32 to vector<8x64xf32>
    %26 = arith.mulf %25, %22 : vector<8x64xf32>
    %27 = arith.select %24, %22, %26 : vector<8x64xi1>, vector<8x64xf32>
    %28 = arith.truncf %27 : vector<8x64xf32> to vector<8x64xbf16>
    %c0_11 = arith.constant 0 : index
    %c0_12 = arith.constant 0 : index
    %29 = vector.load %arg3[%c0_11, %c0_12] : memref<80x128xbf16, #tpu.memory_space<vmem>>, vector<64x128xbf16>
    %cst_13 = arith.constant dense<0.000000e+00> : vector<8x128xf32>
    %30 = tpu.matmul %28, %29, %cst_13 {dimension_numbers = #tpu.dot_dimension_numbers<[1], [0], [0], [1], [0, 0, 1, 1], [], []>} : vector<8x64xbf16>, vector<64x128xbf16>, vector<8x128xf32> -> vector<8x128xf32>
    %31 = vector.broadcast %2 : vector<1x128xf32> to vector<8x128xf32>
    %32 = arith.addf %30, %31 : vector<8x128xf32>
    %cst_14 = arith.constant 0.000000e+00 : f32
    %33 = vector.broadcast %cst_14 : f32 to vector<8x128xf32>
    %34 = arith.cmpf ogt, %32, %33 : vector<8x128xf32>
    %cst_15 = arith.constant 2.000000e-01 : f32
    %35 = vector.broadcast %cst_15 : f32 to vector<8x128xf32>
    %36 = arith.mulf %35, %32 : vector<8x128xf32>
    %37 = arith.select %34, %32, %36 : vector<8x128xi1>, vector<8x128xf32>
    %38 = arith.truncf %37 : vector<8x128xf32> to vector<8x128xbf16>
    %c160 = arith.constant 160 : index
    %c0_16 = arith.constant 0 : index
    %39 = vector.load %arg4[%c160, %c0_16] : memref<288x64xbf16, #tpu.memory_space<vmem>>, vector<128x64xbf16>
    %cst_17 = arith.constant dense<0.000000e+00> : vector<8x64xf32>
    %40 = tpu.matmul %38, %39, %cst_17 {dimension_numbers = #tpu.dot_dimension_numbers<[1], [0], [0], [1], [0, 0, 1, 1], [], []>} : vector<8x128xbf16>, vector<128x64xbf16>, vector<8x64xf32> -> vector<8x64xf32>
    %41 = vector.broadcast %3 : vector<1x64xf32> to vector<8x64xf32>
    %42 = arith.addf %40, %41 : vector<8x64xf32>
    %43 = math.tanh %42 : vector<8x64xf32>
    %44 = arith.truncf %43 : vector<8x64xf32> to vector<8x64xbf16>
    %c32 = arith.constant 32 : index
    %c0_18 = arith.constant 0 : index
    %45 = vector.load %arg4[%c32, %c0_18] : memref<288x64xbf16, #tpu.memory_space<vmem>>, vector<64x64xbf16>
    %cst_19 = arith.constant dense<0.000000e+00> : vector<8x64xf32>
    %46 = tpu.matmul %44, %45, %cst_19 {dimension_numbers = #tpu.dot_dimension_numbers<[1], [0], [0], [1], [0, 0, 1, 1], [], []>} : vector<8x64xbf16>, vector<64x64xbf16>, vector<8x64xf32> -> vector<8x64xf32>
    %47 = vector.extract_strided_slice %16 {offsets = [0, 64], sizes = [8, 64], strides = [1, 1]} : vector<8x128xf32> to vector<8x64xf32>
    %48 = arith.addf %46, %47 : vector<8x64xf32>
    %49 = vector.broadcast %4 : vector<1x64xf32> to vector<8x64xf32>
    %50 = arith.addf %48, %49 : vector<8x64xf32>
    %cst_20 = arith.constant 0.000000e+00 : f32
    %51 = vector.broadcast %cst_20 : f32 to vector<8x64xf32>
    %52 = arith.cmpf ogt, %50, %51 : vector<8x64xf32>
    %cst_21 = arith.constant 2.000000e-01 : f32
    %53 = vector.broadcast %cst_21 : f32 to vector<8x64xf32>
    %54 = arith.mulf %53, %50 : vector<8x64xf32>
    %55 = arith.select %52, %50, %54 : vector<8x64xi1>, vector<8x64xf32>
    %56 = arith.truncf %55 : vector<8x64xf32> to vector<8x64xbf16>
    %c96 = arith.constant 96 : index
    %c0_22 = arith.constant 0 : index
    %57 = vector.load %arg4[%c96, %c0_22] : memref<288x64xbf16, #tpu.memory_space<vmem>>, vector<64x64xbf16>
    %cst_23 = arith.constant dense<0.000000e+00> : vector<8x64xf32>
    %58 = tpu.matmul %56, %57, %cst_23 {dimension_numbers = #tpu.dot_dimension_numbers<[1], [0], [0], [1], [0, 0, 1, 1], [], []>} : vector<8x64xbf16>, vector<64x64xbf16>, vector<8x64xf32> -> vector<8x64xf32>
    %59 = vector.broadcast %5 : vector<1x64xf32> to vector<8x64xf32>
    %60 = arith.addf %58, %59 : vector<8x64xf32>
    %c0_24 = arith.constant 0 : index
    %c0_25 = arith.constant 0 : index
    %61 = vector.load %arg6[%c0_24, %c0_25] : memref<8x128xf32, #tpu.memory_space<vmem>>, vector<8x64xf32>
    tpu.vector_store %arg6[%c0_24, %c0_25], %43 {strides = array<i32>} : memref<8x128xf32, #tpu.memory_space<vmem>>, vector<8x64xf32>,
    %c0_26 = arith.constant 0 : index
    %c64_27 = arith.constant 64 : index
    %62 = vector.load %arg6[%c0_26, %c64_27] : memref<8x128xf32, #tpu.memory_space<vmem>>, vector<8x64xf32>
    tpu.vector_store %arg6[%c0_26, %c64_27], %60 {strides = array<i32>} : memref<8x128xf32, #tpu.memory_space<vmem>>, vector<8x64xf32>,
    return
  }
  func.func @transform_0(%arg0: i32) -> (i32, i32) {
    %c0_i32 = arith.constant 0 : i32
    %c0_i32_0 = arith.constant 0 : i32
    return %arg0, %c0_i32 : i32, i32
  }
  func.func @transform_1(%arg0: i32) -> (i32, i32) {
    %c0_i32 = arith.constant 0 : i32
    %c0_i32_0 = arith.constant 0 : i32
    return %arg0, %c0_i32 : i32, i32
  }
  func.func @transform_2(%arg0: i32) -> (i32, i32) {
    %c0_i32 = arith.constant 0 : i32
    %c0_i32_0 = arith.constant 0 : i32
    %c0_i32_1 = arith.constant 0 : i32
    return %c0_i32, %c0_i32_0 : i32, i32
  }
  func.func @transform_3(%arg0: i32) -> (i32, i32) {
    %c0_i32 = arith.constant 0 : i32
    %c0_i32_0 = arith.constant 0 : i32
    %c0_i32_1 = arith.constant 0 : i32
    return %c0_i32, %c0_i32_0 : i32, i32
  }
  func.func @transform_4(%arg0: i32) -> (i32, i32) {
    %c0_i32 = arith.constant 0 : i32
    %c0_i32_0 = arith.constant 0 : i32
    %c0_i32_1 = arith.constant 0 : i32
    return %c0_i32, %c0_i32_0 : i32, i32
  }
  func.func @transform_5(%arg0: i32) -> (i32, i32) {
    %c0_i32 = arith.constant 0 : i32
    %c0_i32_0 = arith.constant 0 : i32
    return %arg0, %c0_i32 : i32, i32
  }
}

</mosaic_0001>

<llo_original>
// kernel: forward.1
$region0: #{forward.1}
  #allocation0 [shape = 'u32[]', space=smem, size = 0x4, offset = 0x4, fixed_abs, tag = 'smem constant byte address 0x4 - core index']
  #allocation1 [shape = 'u32[144,128]{1,0:T(1,128)}', space=vmem, size = 0x12000, scoped, tag = 'internal scratch']
  %s0 = inlined_call_operand.vmem [shape: f32[8,32], index: 0, kind: input, shape index: {}]
  %s1 = inlined_call_operand.vmem [shape: s32[8,1], index: 1, kind: input, shape index: {}]
  %s2 = inlined_call_operand.vmem [shape: bf16[80,128], index: 2, kind: input, shape index: {}]
  %s3 = inlined_call_operand.vmem [shape: bf16[288,64], index: 3, kind: input, shape index: {}]
  %s4 = inlined_call_operand.vmem [shape: f32[8,128], index: 4, kind: input, shape index: {}]
  %s5 = inlined_call_operand.vmem [shape: f32[8,128], index: 5, kind: output, shape index: {}]
  %s6 = sld [smem:[#allocation0]]
  $region30: #{forward.1} parent=0
    _
  %s8 = ssub.s32 1, %s6
  %s9 = scalar_select 0, %s8, %s6
  // Predicated region
  $region2: #{forward.1} parent=0 // pred_check
    _
  $region3: #{forward.1} parent=0 // pred_check_branch
    %11 = sbr.rel (0) target = $region5
  $region4: #{forward.1} parent=0 // pred_region
    _
  $region5: #{forward.1} parent=0 // pred_fallthru
    _
  // Predicated region
  $region6: #{forward.1} parent=0 // pred_check
    _
  $region7: #{forward.1} parent=0 // pred_check_branch
    %13 = sbr.rel (0) target = $region9
  $region8: #{forward.1} parent=0 // pred_region
    _
  $region9: #{forward.1} parent=0 // pred_fallthru
    _
  // Predicated region
  $region10: #{forward.1} parent=0 // pred_check
    _
  $region11: #{forward.1} parent=0 // pred_check_branch
    %15 = sbr.rel (0) target = $region13
  $region12: #{forward.1} parent=0 // pred_region
    _
  $region13: #{forward.1} parent=0 // pred_fallthru
    _
  // Predicated region
  $region14: #{forward.1} parent=0 // pred_check
    _
  $region15: #{forward.1} parent=0 // pred_check_branch
    %17 = sbr.rel (0) target = $region17
  $region16: #{forward.1} parent=0 // pred_region
    _
  $region17: #{forward.1} parent=0 // pred_fallthru
    _
  // Predicated region
  $region18: #{forward.1} parent=0 // pred_check
    _
  $region19: #{forward.1} parent=0 // pred_check_branch
    %19 = sbr.rel (0) target = $region21
  $region20: #{forward.1} parent=0 // pred_region
    _
  $region21: #{forward.1} parent=0 // pred_fallthru
    _
  %v21 = vld [vmem:[%s4] sm:$0xff]
  %v22 = vld [vmem:[%s1] sm:$0xff]
  %v23 = vlaneseq
  %v24 = vand.u32 %v23, 127
  %25 = vset.pattern.permute.xlu0 0
  %26 = vperm.xlu0 %25, %v22
  %v27 = vpop.permute.xlu0 %26
  %vm28 = vcmp.eq.s32.totalorder %v24, %v27
  %v29 = vsel %vm28, 1, 0
  %v30 = vcvt.s32.f32 %v29
  %v31 = vpack.c.bf16 %v30, %v30
  %v32 = vld [vmem:[%s0] sm:$0xff]
  %v33 = vpack.c.bf16 %v32, %v32
  %v34 = vld [vmem:[%s2 + $0x20] sm:$0xf]
  %v35 = vld [vmem:[%s2 + $0x24] sm:$0xf]
  %v38 = vunpack.c.l.b16 %v34
  %v39 = vunpack.c.l.b16 %v35
  %v40 = vpack.c.b16 %v39, %v38
  %vm42 = vcmask 130048
  %v44 = vsel %vm42, %v31, 0
  %46 = vmatprep.subr.bf16.mxu0 0
  %47 = vmatpush1.bf16.msra.mxu0 0
  %48 = vmatprep.subr.bf16.mxu0 0
  %49 = vmatpush1.bf16.msra.mxu0 0
  %50 = vmatprep.subr.bf16.mxu0 0
  %51 = vmatpush1.bf16.msra.mxu0 0
  %52 = vmatprep.subr.bf16.mxu0 0
  %53 = vmatpush1.bf16.msra.mxu0 0
  %54 = vmatprep.subr.bf16.mxu0 0
  %55 = vmatpush1.bf16.msra.mxu0 0
  %56 = vmatprep.subr.bf16.mxu0 0
  %57 = vmatpush1.bf16.msra.mxu0 0
  %58 = vmatprep.subr.bf16.mxu0 0
  %59 = vmatpush1.bf16.msra.mxu0 0
  %60 = vmatprep.subr.bf16.mxu0 0
  %61 = vmatpush1.bf16.msra.mxu0 %v40
  %62 = vmatprep.subr.bf16.mxu0 0
  %63 = vmatpush2.bf16.msra.mxu0 0
  %64 = vmatprep.subr.bf16.mxu0 0
  %65 = vmatpush2.bf16.msra.mxu0 0
  %66 = vmatprep.subr.bf16.mxu0 0
  %67 = vmatpush2.bf16.msra.mxu0 0
  %68 = vmatprep.subr.bf16.mxu0 0
  %69 = vmatpush2.bf16.msra.mxu0 0
  %70 = vmatprep.subr.bf16.mxu0 0
  %71 = vmatpush2.bf16.msra.mxu0 0
  %72 = vmatprep.subr.bf16.mxu0 0
  %73 = vmatpush2.bf16.msra.mxu0 0
  %74 = vmatprep.subr.bf16.mxu0 0
  %75 = vmatpush2.bf16.msra.mxu0 0
  %76 = vmatprep.subr.bf16.mxu0 0
  %77 = vmatpush2.bf16.msra.mxu0 0
  %78 = vmatprep.mubr.bf16.mxu0 0
  %79 = vmatmul.mubr.bf16.gmra.mxu0 %v44
  %v80 = vpop.f32.mrf.mxu0
  %v81 = vadd.f32 0.0, %v80
  %v82 = vpop.f32.mrf.mxu0
  %v83 = vpop.f32.mrf.mxu0
  %v84 = vpop.f32.mrf.mxu0
  %85 = vdwg.mxu0
  %v86 = vld [vmem:[%s3] sm:$0xf]
  %v87 = vld [vmem:[%s3 + $0x4] sm:$0xf]
  %v88 = vld [vmem:[%s3 + $0x8] sm:$0xf]
  %v89 = vld [vmem:[%s3 + $0xc] sm:$0xf]
  %v94 = vunpack.c.l.b16 %v86
  %v95 = vunpack.c.l.b16 %v87
  %v96 = vunpack.c.l.b16 %v88
  %v97 = vunpack.c.l.b16 %v89
  %v98 = vpack.c.b16 %v95, %v94
  %v99 = vpack.c.b16 %v97, %v96
  %vm102 = vcmask 261120
  %v104 = vsel %vm102, %v33, 0
  %106 = vmatprep.subr.bf16.mxu0 0
  %107 = vmatpush1.bf16.msra.mxu0 0
  %108 = vmatprep.subr.bf16.mxu0 0
  %109 = vmatpush1.bf16.msra.mxu0 0
  %110 = vmatprep.subr.bf16.mxu0 0
  %111 = vmatpush1.bf16.msra.mxu0 0
  %112 = vmatprep.subr.bf16.mxu0 0
  %113 = vmatpush1.bf16.msra.mxu0 0
  %114 = vmatprep.subr.bf16.mxu0 0
  %115 = vmatpush1.bf16.msra.mxu0 0
  %116 = vmatprep.subr.bf16.mxu0 0
  %117 = vmatpush1.bf16.msra.mxu0 0
  %118 = vmatprep.subr.bf16.mxu0 0
  %119 = vmatpush1.bf16.msra.mxu0 %v99
  %120 = vmatprep.subr.bf16.mxu0 0
  %121 = vmatpush1.bf16.msra.mxu0 %v98
  %122 = vmatprep.subr.bf16.mxu0 0
  %123 = vmatpush2.bf16.msra.mxu0 0
  %124 = vmatprep.subr.bf16.mxu0 0
  %125 = vmatpush2.bf16.msra.mxu0 0
  %126 = vmatprep.subr.bf16.mxu0 0
  %127 = vmatpush2.bf16.msra.mxu0 0
  %128 = vmatprep.subr.bf16.mxu0 0
  %129 = vmatpush2.bf16.msra.mxu0 0
  %130 = vmatprep.subr.bf16.mxu0 0
  %131 = vmatpush2.bf16.msra.mxu0 0
  %132 = vmatprep.subr.bf16.mxu0 0
  %133 = vmatpush2.bf16.msra.mxu0 0
  %134 = vmatprep.subr.bf16.mxu0 0
  %135 = vmatpush2.bf16.msra.mxu0 0
  %136 = vmatprep.subr.bf16.mxu0 0
  %137 = vmatpush2.bf16.msra.mxu0 0
  %138 = vmatprep.mubr.bf16.mxu0 0
  %139 = vmatmul.mubr.bf16.gmra.mxu0 %v104
  %v140 = vpop.f32.mrf.mxu0
  %v141 = vadd.f32 %v81, %v140
  %v142 = vpop.f32.mrf.mxu0
  %v143 = vpop.f32.mrf.mxu0
  %v144 = vpop.f32.mrf.mxu0
  %145 = vdwg.mxu0
  %v146 = vlaneseq
  %v147 = vshrl.u32 %v146, 7
  %v148 = vsub.s32 0, %v147
  %v149 = vrot.slane %v21, %v148
  %v150 = vadd.f32 %v141, %v149
  %vm151 = vcmp.gt.f32.partialorder %v150, 0.0
  %v152 = vmul.f32 %v150, 0.2
  %v153 = vsel %vm151, %v150, %v152
  %v154 = vpack.c.bf16 %v153, %v153
  %v155 = vld [vmem:[%s2] sm:$0xf]
  %v156 = vld [vmem:[%s2 + $0x4] sm:$0xf]
  %v157 = vld [vmem:[%s2 + $0x8] sm:$0xf]
  %v158 = vld [vmem:[%s2 + $0xc] sm:$0xf]
  %v159 = vld [vmem:[%s2 + $0x10] sm:$0xf]
  %v160 = vld [vmem:[%s2 + $0x14] sm:$0xf]
  %v161 = vld [vmem:[%s2 + $0x18] sm:$0xf]
  %v162 = vld [vmem:[%s2 + $0x1c] sm:$0xf]
  %v163 = vlaneseq
  %v164 = vshrl.u32 %v163, 7
  %v165 = vsub.s32 1, %v164
  %v166 = vrot.slane %v21, %v165
  %v175 = vunpack.c.l.b16 %v155
  %v176 = vunpack.c.l.b16 %v156
  %v177 = vunpack.c.l.b16 %v157
  %v178 = vunpack.c.l.b16 %v158
  %v179 = vunpack.c.l.b16 %v159
  %v180 = vunpack.c.l.b16 %v160
  %v181 = vunpack.c.l.b16 %v161
  %v182 = vunpack.c.l.b16 %v162
  %v183 = vpack.c.b16 %v176, %v175
  %v184 = vpack.c.b16 %v178, %v177
  %v185 = vpack.c.b16 %v180, %v179
  %v186 = vpack.c.b16 %v182, %v181
  %vm191 = vcmask 523264
  %v193 = vsel %vm191, %v154, 0
  %195 = vmatprep.subr.bf16.mxu0 0
  %196 = vmatpush1.bf16.msra.mxu0 0
  %197 = vmatprep.subr.bf16.mxu0 0
  %198 = vmatpush1.bf16.msra.mxu0 0
  %199 = vmatprep.subr.bf16.mxu0 0
  %200 = vmatpush1.bf16.msra.mxu0 0
  %201 = vmatprep.subr.bf16.mxu0 0
  %202 = vmatpush1.bf16.msra.mxu0 0
  %203 = vmatprep.subr.bf16.mxu0 0
  %204 = vmatpush1.bf16.msra.mxu0 %v186
  %205 = vmatprep.subr.bf16.mxu0 0
  %206 = vmatpush1.bf16.msra.mxu0 %v185
  %207 = vmatprep.subr.bf16.mxu0 0
  %208 = vmatpush1.bf16.msra.mxu0 %v184
  %209 = vmatprep.subr.bf16.mxu0 0
  %210 = vmatpush1.bf16.msra.mxu0 %v183
  %211 = vmatprep.subr.bf16.mxu0 0
  %212 = vmatpush2.bf16.msra.mxu0 0
  %213 = vmatprep.subr.bf16.mxu0 0
  %214 = vmatpush2.bf16.msra.mxu0 0
  %215 = vmatprep.subr.bf16.mxu0 0
  %216 = vmatpush2.bf16.msra.mxu0 0
  %217 = vmatprep.subr.bf16.mxu0 0
  %218 = vmatpush2.bf16.msra.mxu0 0
  %219 = vmatprep.subr.bf16.mxu0 0
  %220 = vmatpush2.bf16.msra.mxu0 0
  %221 = vmatprep.subr.bf16.mxu0 0
  %222 = vmatpush2.bf16.msra.mxu0 0
  %223 = vmatprep.subr.bf16.mxu0 0
  %224 = vmatpush2.bf16.msra.mxu0 0
  %225 = vmatprep.subr.bf16.mxu0 0
  %226 = vmatpush2.bf16.msra.mxu0 0
  %227 = vmatprep.mubr.bf16.mxu0 0
  %228 = vmatmul.mubr.bf16.gmra.mxu0 %v193
  %v229 = vpop.f32.mrf.mxu0
  %v230 = vadd.f32 %v166, %v229
  %v231 = vpop.f32.mrf.mxu0
  %v232 = vpop.f32.mrf.mxu0
  %v233 = vpop.f32.mrf.mxu0
  %234 = vdwg.mxu0
  %vm235 = vcmp.gt.f32.partialorder %v230, 0.0
  %v236 = vmul.f32 %v230, 0.2
  %v237 = vsel %vm235, %v230, %v236
  %v238 = vpack.c.bf16 %v237, %v237
  %v239 = vld [vmem:[%s3 + $0x50] sm:$0xf]
  %v240 = vld [vmem:[%s3 + $0x54] sm:$0xf]
  %v241 = vld [vmem:[%s3 + $0x58] sm:$0xf]
  %v242 = vld [vmem:[%s3 + $0x5c] sm:$0xf]
  %v243 = vld [vmem:[%s3 + $0x60] sm:$0xf]
  %v244 = vld [vmem:[%s3 + $0x64] sm:$0xf]
  %v245 = vld [vmem:[%s3 + $0x68] sm:$0xf]
  %v246 = vld [vmem:[%s3 + $0x6c] sm:$0xf]
  %v247 = vld [vmem:[%s3 + $0x70] sm:$0xf]
  %v248 = vld [vmem:[%s3 + $0x74] sm:$0xf]
  %v249 = vld [vmem:[%s3 + $0x78] sm:$0xf]
  %v250 = vld [vmem:[%s3 + $0x7c] sm:$0xf]
  %v251 = vld [vmem:[%s3 + $0x80] sm:$0xf]
  %v252 = vld [vmem:[%s3 + $0x84] sm:$0xf]
  %v253 = vld [vmem:[%s3 + $0x88] sm:$0xf]
  %v254 = vld [vmem:[%s3 + $0x8c] sm:$0xf]
  %v255 = vlaneseq
  %v256 = vshrl.u32 %v255, 7
  %v257 = vsub.s32 2, %v256
  %v258 = vrot.slane %v21, %v257
  %v275 = vunpack.c.l.b16 %v239
  %v276 = vunpack.c.l.b16 %v240
  %v277 = vunpack.c.l.b16 %v241
  %v278 = vunpack.c.l.b16 %v242
  %v279 = vunpack.c.l.b16 %v243
  %v280 = vunpack.c.l.b16 %v244
  %v281 = vunpack.c.l.b16 %v245
  %v282 = vunpack.c.l.b16 %v246
  %v283 = vunpack.c.l.b16 %v247
  %v284 = vunpack.c.l.b16 %v248
  %v285 = vunpack.c.l.b16 %v249
  %v286 = vunpack.c.l.b16 %v250
  %v287 = vunpack.c.l.b16 %v251
  %v288 = vunpack.c.l.b16 %v252
  %v289 = vunpack.c.l.b16 %v253
  %v290 = vunpack.c.l.b16 %v254
  %v291 = vpack.c.b16 %v276, %v275
  %v292 = vpack.c.b16 %v278, %v277
  %v293 = vpack.c.b16 %v280, %v279
  %v294 = vpack.c.b16 %v282, %v281
  %v295 = vpack.c.b16 %v284, %v283
  %v296 = vpack.c.b16 %v286, %v285
  %v297 = vpack.c.b16 %v288, %v287
  %v298 = vpack.c.b16 %v290, %v289
  %307 = vmatprep.subr.bf16.mxu0 0
  %308 = vmatpush1.bf16.msra.mxu0 %v298
  %309 = vmatprep.subr.bf16.mxu0 0
  %310 = vmatpush1.bf16.msra.mxu0 %v297
  %311 = vmatprep.subr.bf16.mxu0 0
  %312 = vmatpush1.bf16.msra.mxu0 %v296
  %313 = vmatprep.subr.bf16.mxu0 0
  %314 = vmatpush1.bf16.msra.mxu0 %v295
  %315 = vmatprep.subr.bf16.mxu0 0
  %316 = vmatpush1.bf16.msra.mxu0 %v294
  %317 = vmatprep.subr.bf16.mxu0 0
  %318 = vmatpush1.bf16.msra.mxu0 %v293
  %319 = vmatprep.subr.bf16.mxu0 0
  %320 = vmatpush1.bf16.msra.mxu0 %v292
  %321 = vmatprep.subr.bf16.mxu0 0
  %322 = vmatpush1.bf16.msra.mxu0 %v291
  %323 = vmatprep.subr.bf16.mxu0 0
  %324 = vmatpush2.bf16.msra.mxu0 0
  %325 = vmatprep.subr.bf16.mxu0 0
  %326 = vmatpush2.bf16.msra.mxu0 0
  %327 = vmatprep.subr.bf16.mxu0 0
  %328 = vmatpush2.bf16.msra.mxu0 0
  %329 = vmatprep.subr.bf16.mxu0 0
  %330 = vmatpush2.bf16.msra.mxu0 0
  %331 = vmatprep.subr.bf16.mxu0 0
  %332 = vmatpush2.bf16.msra.mxu0 0
  %333 = vmatprep.subr.bf16.mxu0 0
  %334 = vmatpush2.bf16.msra.mxu0 0
  %335 = vmatprep.subr.bf16.mxu0 0
  %336 = vmatpush2.bf16.msra.mxu0 0
  %337 = vmatprep.subr.bf16.mxu0 0
  %338 = vmatpush2.bf16.msra.mxu0 0
  %339 = vmatprep.mubr.bf16.mxu0 0
  %340 = vmatmul.mubr.bf16.gmra.mxu0 %v238
  %v341 = vpop.f32.mrf.mxu0
  %v342 = vadd.f32 %v258, %v341
  %v343 = vpop.f32.mrf.mxu0
  %v344 = vpop.f32.mrf.mxu0
  %v345 = vpop.f32.mrf.mxu0
  %346 = vdwg.mxu0
  %v347 = vtanh.pop %v342
  %v348 = vpack.c.bf16 %v347, %v347
  %v349 = vld [vmem:[%s3 + $0x10] sm:$0xf]
  %v350 = vld [vmem:[%s3 + $0x14] sm:$0xf]
  %v351 = vld [vmem:[%s3 + $0x18] sm:$0xf]
  %v352 = vld [vmem:[%s3 + $0x1c] sm:$0xf]
  %v353 = vld [vmem:[%s3 + $0x20] sm:$0xf]
  %v354 = vld [vmem:[%s3 + $0x24] sm:$0xf]
  %v355 = vld [vmem:[%s3 + $0x28] sm:$0xf]
  %v356 = vld [vmem:[%s3 + $0x2c] sm:$0xf]
  %v365 = vunpack.c.l.b16 %v349
  %v366 = vunpack.c.l.b16 %v350
  %v367 = vunpack.c.l.b16 %v351
  %v368 = vunpack.c.l.b16 %v352
  %v369 = vunpack.c.l.b16 %v353
  %v370 = vunpack.c.l.b16 %v354
  %v371 = vunpack.c.l.b16 %v355
  %v372 = vunpack.c.l.b16 %v356
  %v373 = vpack.c.b16 %v366, %v365
  %v374 = vpack.c.b16 %v368, %v367
  %v375 = vpack.c.b16 %v370, %v369
  %v376 = vpack.c.b16 %v372, %v371
  %382 = vrot.lane.b32.xlu0 %v81, 64
  %v383 = vpop.permute.xlu0 %382
  %v386 = vsel %vm191, %v348, 0
  %388 = vmatprep.subr.bf16.mxu0 0
  %389 = vmatpush1.bf16.msra.mxu0 0
  %390 = vmatprep.subr.bf16.mxu0 0
  %391 = vmatpush1.bf16.msra.mxu0 0
  %392 = vmatprep.subr.bf16.mxu0 0
  %393 = vmatpush1.bf16.msra.mxu0 0
  %394 = vmatprep.subr.bf16.mxu0 0
  %395 = vmatpush1.bf16.msra.mxu0 0
  %396 = vmatprep.subr.bf16.mxu0 0
  %397 = vmatpush1.bf16.msra.mxu0 %v376
  %398 = vmatprep.subr.bf16.mxu0 0
  %399 = vmatpush1.bf16.msra.mxu0 %v375
  %400 = vmatprep.subr.bf16.mxu0 0
  %401 = vmatpush1.bf16.msra.mxu0 %v374
  %402 = vmatprep.subr.bf16.mxu0 0
  %403 = vmatpush1.bf16.msra.mxu0 %v373
  %404 = vmatprep.subr.bf16.mxu0 0
  %405 = vmatpush2.bf16.msra.mxu0 0
  %406 = vmatprep.subr.bf16.mxu0 0
  %407 = vmatpush2.bf16.msra.mxu0 0
  %408 = vmatprep.subr.bf16.mxu0 0
  %409 = vmatpush2.bf16.msra.mxu0 0
  %410 = vmatprep.subr.bf16.mxu0 0
  %411 = vmatpush2.bf16.msra.mxu0 0
  %412 = vmatprep.subr.bf16.mxu0 0
  %413 = vmatpush2.bf16.msra.mxu0 0
  %414 = vmatprep.subr.bf16.mxu0 0
  %415 = vmatpush2.bf16.msra.mxu0 0
  %416 = vmatprep.subr.bf16.mxu0 0
  %417 = vmatpush2.bf16.msra.mxu0 0
  %418 = vmatprep.subr.bf16.mxu0 0
  %419 = vmatpush2.bf16.msra.mxu0 0
  %420 = vmatprep.mubr.bf16.mxu0 0
  %421 = vmatmul.mubr.bf16.gmra.mxu0 %v386
  %v422 = vpop.f32.mrf.mxu0
  %v423 = vadd.f32 %v383, %v422
  %v424 = vpop.f32.mrf.mxu0
  %v425 = vpop.f32.mrf.mxu0
  %v426 = vpop.f32.mrf.mxu0
  %427 = vdwg.mxu0
  %v428 = vlaneseq
  %v429 = vshrl.u32 %v428, 7
  %v430 = vsub.s32 3, %v429
  %v431 = vrot.slane %v21, %v430
  %v432 = vadd.f32 %v423, %v431
  %vm433 = vcmp.gt.f32.partialorder %v432, 0.0
  %v434 = vmul.f32 %v432, 0.2
  %v435 = vsel %vm433, %v432, %v434
  %v436 = vpack.c.bf16 %v435, %v435
  %v437 = vld [vmem:[%s3 + $0x30] sm:$0xf]
  %v438 = vld [vmem:[%s3 + $0x34] sm:$0xf]
  %v439 = vld [vmem:[%s3 + $0x38] sm:$0xf]
  %v440 = vld [vmem:[%s3 + $0x3c] sm:$0xf]
  %v441 = vld [vmem:[%s3 + $0x40] sm:$0xf]
  %v442 = vld [vmem:[%s3 + $0x44] sm:$0xf]
  %v443 = vld [vmem:[%s3 + $0x48] sm:$0xf]
  %v444 = vld [vmem:[%s3 + $0x4c] sm:$0xf]
  %v445 = vlaneseq
  %v446 = vshrl.u32 %v445, 7
  %v447 = vsub.s32 4, %v446
  %v448 = vrot.slane %v21, %v447
  %v457 = vunpack.c.l.b16 %v437
  %v458 = vunpack.c.l.b16 %v438
  %v459 = vunpack.c.l.b16 %v439
  %v460 = vunpack.c.l.b16 %v440
  %v461 = vunpack.c.l.b16 %v441
  %v462 = vunpack.c.l.b16 %v442
  %v463 = vunpack.c.l.b16 %v443
  %v464 = vunpack.c.l.b16 %v444
  %v465 = vpack.c.b16 %v458, %v457
  %v466 = vpack.c.b16 %v460, %v459
  %v467 = vpack.c.b16 %v462, %v461
  %v468 = vpack.c.b16 %v464, %v463
  %v474 = vsel %vm191, %v436, 0
  %476 = vmatprep.subr.bf16.mxu0 0
  %477 = vmatpush1.bf16.msra.mxu0 0
  %478 = vmatprep.subr.bf16.mxu0 0
  %479 = vmatpush1.bf16.msra.mxu0 0
  %480 = vmatprep.subr.bf16.mxu0 0
  %481 = vmatpush1.bf16.msra.mxu0 0
  %482 = vmatprep.subr.bf16.mxu0 0
  %483 = vmatpush1.bf16.msra.mxu0 0
  %484 = vmatprep.subr.bf16.mxu0 0
  %485 = vmatpush1.bf16.msra.mxu0 %v468
  %486 = vmatprep.subr.bf16.mxu0 0
  %487 = vmatpush1.bf16.msra.mxu0 %v467
  %488 = vmatprep.subr.bf16.mxu0 0
  %489 = vmatpush1.bf16.msra.mxu0 %v466
  %490 = vmatprep.subr.bf16.mxu0 0
  %491 = vmatpush1.bf16.msra.mxu0 %v465
  %492 = vmatprep.subr.bf16.mxu0 0
  %493 = vmatpush2.bf16.msra.mxu0 0
  %494 = vmatprep.subr.bf16.mxu0 0
  %495 = vmatpush2.bf16.msra.mxu0 0
  %496 = vmatprep.subr.bf16.mxu0 0
  %497 = vmatpush2.bf16.msra.mxu0 0
  %498 = vmatprep.subr.bf16.mxu0 0
  %499 = vmatpush2.bf16.msra.mxu0 0
  %500 = vmatprep.subr.bf16.mxu0 0
  %501 = vmatpush2.bf16.msra.mxu0 0
  %502 = vmatprep.subr.bf16.mxu0 0
  %503 = vmatpush2.bf16.msra.mxu0 0
  %504 = vmatprep.subr.bf16.mxu0 0
  %505 = vmatpush2.bf16.msra.mxu0 0
  %506 = vmatprep.subr.bf16.mxu0 0
  %507 = vmatpush2.bf16.msra.mxu0 0
  %508 = vmatprep.mubr.bf16.mxu0 0
  %509 = vmatmul.mubr.bf16.gmra.mxu0 %v474
  %v510 = vpop.f32.mrf.mxu0
  %v511 = vadd.f32 %v448, %v510
  %v512 = vpop.f32.mrf.mxu0
  %v513 = vpop.f32.mrf.mxu0
  %v514 = vpop.f32.mrf.mxu0
  %515 = vdwg.mxu0
  %516 = vst.msk [vmem:[%s5] sm:$0xff] %vm191, %v347
  %518 = vrot.lane.b32.xlu0 %v511, 64
  %v519 = vpop.permute.xlu0 %518
  %vm521 = vcmask 1048064
  %522 = vst.msk [vmem:[%s5] sm:$0xff] %vm521, %v519
  // Predicated region
  $region22: #{forward.1} parent=0 // pred_check
    _
  $region23: #{forward.1} parent=0 // pred_check_branch
    %524 = sbr.rel (0) target = $region25
  $region24: #{forward.1} parent=0 // pred_region
    _
  $region25: #{forward.1} parent=0 // pred_fallthru
    _
  // Predicated region
  $region26: #{forward.1} parent=0 // pred_check
    _
  $region27: #{forward.1} parent=0 // pred_check_branch
    %526 = sbr.rel (0) target = $region29
  $region28: #{forward.1} parent=0 // pred_region
    _
  $region29: #{forward.1} parent=0 // pred_fallthru
    _

</llo_original>
